<compile_context>
chip_gen: v7x
topology: tpu7x:2x2x1
jax: 0.10.0
libtpu: 0.0.40
codegen_flags: <defaults>
</compile_context>

<pallas_src>
import math
from functools import partial

import jax
import jax.numpy as jnp
from jax.experimental import pallas as pl
from jax.experimental.pallas import tpu as pltpu


# ---------------------------------------------------------------------------
# Sinusoidal positional-encoding table (built once, like register_buffer).
# Stored 2-D (max_len, d_model) in the model dtype.
# ---------------------------------------------------------------------------
def make_pe(d_model: int, max_len: int = 1000, dtype=jnp.float32) -> jnp.ndarray:
    position = jnp.arange(0, max_len, dtype=jnp.float32)[:, None]            # (L, 1)
    div_term = jnp.exp(
        jnp.arange(0, d_model, 2, dtype=jnp.float32) * (-math.log(10000.0) / d_model)
    )                                                                         # (D/2,)
    pe = jnp.zeros((max_len, d_model), dtype=jnp.float32)
    pe = pe.at[:, 0::2].set(jnp.sin(position * div_term))
    pe = pe.at[:, 1::2].set(jnp.cos(position * div_term))
    return pe.astype(dtype)                                                   # (L, D)


# ---------------------------------------------------------------------------
# Fused Pallas kernel: feature Linear + PositionalEncoding add.
#   x_ref: (F, TT)   w_ref: (F, D)   b_ref: (1, D)   pe_ref: (TT, D)   o_ref: (TT, D)
# ---------------------------------------------------------------------------
def _feature_pe_kernel(x_ref, w_ref, b_ref, pe_ref, o_ref, *, mxu_bf16):
    x = x_ref[...]                                    # (F, TT) — no wrapper transpose
    w = w_ref[...]                                    # (F, D)
    if mxu_bf16:
        x = x.astype(jnp.bfloat16)                    # MXU-native width on v5e/v6e/v7x
        w = w.astype(jnp.bfloat16)
    # Contract F (dim 0 of both operands): out[t, d] = sum_f x[f, t] * w[f, d].
    # The MXU takes a transposed LHS natively; no in-kernel XLU transpose.
    acc = jax.lax.dot_general(x, w, dimension_numbers=(((0,), (0,)), ((), ())),
                              preferred_element_type=jnp.float32)             # (TT, D)
    # Bias / PE adds stay in f32 (v5e has no bf16 VPU).
    acc = acc + b_ref[...].astype(jnp.float32) + pe_ref[...].astype(jnp.float32)
    o_ref[...] = acc.astype(o_ref.dtype)              # explicit downcast (bf16-safe)


_MIN_LANE_D = 128          # below this, stores are masked vst.msk -> plain-JAX fallback
_MIN_FLOPS_ELEMS = 10_000_000   # ~N*T*F*D below this, launch overhead dominates


def _vmem_budget_and_limit():
    """(pipelined-block budget, scoped vmem limit) derived from the chip's VMEM size."""
    cap = 64 * 1024 * 1024                 # conservative default: v7x per-TC VMEM
    try:
        info = pltpu.get_tpu_info()
        cap_attr = getattr(info, "vmem_capacity_bytes", None)
        if cap_attr:
            cap = int(cap_attr)
    except Exception:
        pass
    budget = int(cap * 0.60)               # ~38 MiB on v7x, ~76 MiB on v5e/v6e
    limit = min(int(cap * 0.75), cap - (8 << 20))   # leave headroom for Mosaic scratch
    return budget, limit


def _pick_seq_tile(T, N, F, D, itemsize, budget):
    """Largest seq tile TT (multiple of 128 dividing T, else T) fitting `budget`.

    TT is the lane dim of the (F, TT) x tile, hence the multiple-of-128 requirement
    (which also keeps it legal for bf16/int8 native tiles).
    """
    def footprint(tt):
        blocks = 2 * tt * (F + 2 * D)        # double-buffered x-in, pe-in, out blocks
        resident = 2 * (F * D + D)           # W + bias (constant index, double-buffered)
        return itemsize * (blocks + resident)

    cands = [t for t in (4096, 2048, 1024, 512, 256, 128)
             if T % t == 0 and footprint(t) <= budget]
    if not cands:
        return T                              # full-extent block: always a legal shape
    if N == 1:
        # Keep >= 2 grid steps so both v7x TensorCores have work.
        multi = [t for t in cands if T // t >= 2]
        if multi:
            return multi[0]
    return cands[0]


def feature_pos_encode(x_nft, W, b, pe, *, mxu_bf16=True):
    """out[n, t, :] = x_nft[n, :, t] @ W + b + pe[t, :].

    x_nft: (N, F, T)  — the free reshape of `src`, NOT transposed.
    W: (F, D);  b: (1, D);  pe: (max_len, D)   ->   (N, T, D) batch-first.
    """
    N, F, T = x_nft.shape
    D = W.shape[1]
    if T > pe.shape[0]:
        raise ValueError(f"sequence length {T} exceeds positional table ({pe.shape[0]})")
    pe_s = pe[:T]                              # static slice: keeps pe block in-bounds

    # Small-size fallback (module defaults: F = D = 6..32): XLA fuses bias + PE into the
    # matmul for free and the Pallas path cannot win at D < 128 lanes.
    if D < _MIN_LANE_D or (N * T * F * D) < _MIN_FLOPS_ELEMS:
        out = jnp.einsum("nft,fd->ntd", x_nft, W) + b + pe_s[None]
        return out.astype(x_nft.dtype)

    itemsize = max(x_nft.dtype.itemsize, W.dtype.itemsize, pe.dtype.itemsize)
    budget, vmem_limit = _vmem_budget_and_limit()
    TT = _pick_seq_tile(T, N, F, D, itemsize, budget)
    grid = (T // TT, N)        # t outer, n inner: pe tile is fetched once per seq tile

    flops = 2 * N * T * F * D
    bytes_accessed = (x_nft.size * x_nft.dtype.itemsize + W.size * W.dtype.itemsize
                      + b.size * b.dtype.itemsize + pe_s.size * pe_s.dtype.itemsize
                      + N * T * D * x_nft.dtype.itemsize)

    return pl.pallas_call(
        partial(_feature_pe_kernel, mxu_bf16=mxu_bf16),
        out_shape=jax.ShapeDtypeStruct((N, T, D), x_nft.dtype),
        grid_spec=pltpu.PrefetchScalarGridSpec(
            num_scalar_prefetch=0,
            grid=grid,
            in_specs=[
                pl.BlockSpec((None, F, TT), lambda t, n: (n, 0, t)),   # x tile (F, TT)
                pl.BlockSpec((F, D), lambda t, n: (0, 0)),             # W (stays resident)
                pl.BlockSpec((1, D), lambda t, n: (0, 0)),             # bias
                pl.BlockSpec((TT, D), lambda t, n: (t, 0)),            # pe rows: const over n
            ],
            out_specs=pl.BlockSpec((None, TT, D), lambda t, n: (n, t, 0)),  # lane-dense D
        ),
        compiler_params=pltpu.CompilerParams(
            dimension_semantics=("parallel", "parallel"),
            vmem_limit_bytes=vmem_limit,
        ),
        cost_estimate=pl.CostEstimate(
            flops=int(flops), transcendentals=0, bytes_accessed=int(bytes_accessed)),
    )(x_nft, W, b, pe_s)


# ---------------------------------------------------------------------------
# Plain-JAX transformer encoder / decoder (PyTorch post-norm layers, ReLU FFN),
# rewritten batch-first so the Pallas (N, T, D) output needs no transpose pass.
# ---------------------------------------------------------------------------
def _layer_norm(x, g, b, eps=1e-5):
    mean = jnp.mean(x, axis=-1, keepdims=True)
    var = jnp.mean(jnp.square(x - mean), axis=-1, keepdims=True)
    return (x - mean) * jax.lax.rsqrt(var + eps) * g + b


def _mha(p, q_in, k_in, v_in, nhead, attn_mask=None):
    # Batch-first (N, L, E) — mathematically identical to PyTorch's seq-first MHA.
    N, L, E = q_in.shape
    S = k_in.shape[1]
    hd = E // nhead
    q = (q_in @ p["Wq"] + p["bq"]).reshape(N, L, nhead, hd)
    k = (k_in @ p["Wk"] + p["bk"]).reshape(N, S, nhead, hd)
    v = (v_in @ p["Wv"] + p["bv"]).reshape(N, S, nhead, hd)
    scores = jnp.einsum("nlhd,nshd->nhls", q, k) / math.sqrt(hd)
    if attn_mask is not None:
        scores = scores + attn_mask                          # (L, S) broadcast
    attn = jax.nn.softmax(scores, axis=-1)
    out = jnp.einsum("nhls,nshd->nlhd", attn, v).reshape(N, L, E)
    return out @ p["Wo"] + p["bo"]


def _encoder_layer(p, x, nhead):
    x = _layer_norm(x + _mha(p["self_attn"], x, x, x, nhead), p["ln1_g"], p["ln1_b"])
    ff = jax.nn.relu(x @ p["W1"] + p["b1"]) @ p["W2"] + p["b2"]
    return _layer_norm(x + ff, p["ln2_g"], p["ln2_b"])


def _decoder_layer(p, x, mem, nhead, tgt_mask):
    x = _layer_norm(x + _mha(p["self_attn"], x, x, x, nhead, tgt_mask), p["ln1_g"], p["ln1_b"])
    x = _layer_norm(x + _mha(p["cross_attn"], x, mem, mem, nhead), p["ln2_g"], p["ln2_b"])
    ff = jax.nn.relu(x @ p["W1"] + p["b1"]) @ p["W2"] + p["b2"]
    return _layer_norm(x + ff, p["ln3_g"], p["ln3_b"])


def _run_decoder(layers, tgt, mem, nhead, tgt_mask=None):
    x = tgt
    for p in layers:
        x = _decoder_layer(p, x, mem, nhead, tgt_mask)
    return x


def _causal_mask(sz):
    i = jnp.arange(sz)
    return jnp.where(i[:, None] >= i[None, :], 0.0, -jnp.inf).astype(jnp.float32)


def transformer_forward(params, src, tgt_input, *, d_feat, nhead):
    """Mirrors Transformer.forward (Transf/full_transf.py); batch-first internally."""
    N = src.shape[0]
    x_nft = src.reshape(N, d_feat, -1)                 # (N, F, T): free reshape, no transpose
    # feature_layer + pos_encoder fused in one Pallas pass over x:
    h = feature_pos_encode(x_nft, params["W_feat"], params["b_feat"], params["pe"])  # (N, T, D)

    enc = h
    for p in params["enc_layers"]:
        enc = _encoder_layer(p, enc, nhead)
    memory = enc[:, -1:, :]                            # last time step: (N, 1, D)

    # tgt_input follows the module's seq-first (S, N, D) interface; only its first step
    # is used, so the layout change below touches a (N, 1, D)-sized tensor only.
    tgt = tgt_input[:1, :, :].transpose(1, 0, 2)       # (N, 1, D)
    dec = _run_decoder(params["dec_layers"], tgt, memory, nhead)
    predict = dec[:, :1, :] @ params["W_pred"] + params["b_pred"]
    for i in range(1, 5):
        tgt = jnp.concatenate([tgt, predict], axis=1)
        dec = _run_decoder(params["dec_layers"], tgt, memory, nhead, _causal_mask(i + 1))
        predict = dec[:, i:i + 1, :] @ params["W_pred"] + params["b_pred"]
    return tgt                                         # (N, 5, D) — already batch-first


# ---------------------------------------------------------------------------
# Parameter initialization (PyTorch-Linear-style uniform init, deterministic).
# ---------------------------------------------------------------------------
def _linear(key, fan_in, fan_out):
    kw, kb = jax.random.split(key)
    bound = 1.0 / math.sqrt(fan_in)
    W = jax.random.uniform(kw, (fan_in, fan_out), jnp.float32, -bound, bound)
    b = jax.random.uniform(kb, (fan_out,), jnp.float32, -bound, bound)
    return W, b


def _attn_params(key, d_model):
    ks = jax.random.split(key, 4)
    Wq, bq = _linear(ks[0], d_model, d_model)
    Wk, bk = _linear(ks[1], d_model, d_model)
    Wv, bv = _linear(ks[2], d_model, d_model)
    Wo, bo = _linear(ks[3], d_model, d_model)
    return dict(Wq=Wq, bq=bq, Wk=Wk, bk=bk, Wv=Wv, bv=bv, Wo=Wo, bo=bo)


def _enc_layer_init(key, d_model, d_ff):
    ks = jax.random.split(key, 3)
    W1, b1 = _linear(ks[1], d_model, d_ff)
    W2, b2 = _linear(ks[2], d_ff, d_model)
    ones, zeros = jnp.ones((d_model,), jnp.float32), jnp.zeros((d_model,), jnp.float32)
    return dict(self_attn=_attn_params(ks[0], d_model), W1=W1, b1=b1, W2=W2, b2=b2,
                ln1_g=ones, ln1_b=zeros, ln2_g=ones, ln2_b=zeros)


def _dec_layer_init(key, d_model, d_ff):
    ks = jax.random.split(key, 4)
    W1, b1 = _linear(ks[2], d_model, d_ff)
    W2, b2 = _linear(ks[3], d_ff, d_model)
    ones, zeros = jnp.ones((d_model,), jnp.float32), jnp.zeros((d_model,), jnp.float32)
    return dict(self_attn=_attn_params(ks[0], d_model), cross_attn=_attn_params(ks[1], d_model),
                W1=W1, b1=b1, W2=W2, b2=b2,
                ln1_g=ones, ln1_b=zeros, ln2_g=ones, ln2_b=zeros, ln3_g=ones, ln3_b=zeros)


def init_params(key, d_feat, d_model, nhead, num_layers, d_ff=2048, max_len=1000,
                dtype=jnp.float32):
    assert d_model % nhead == 0
    assert d_feat == d_model, "module concatenates predictor output onto tgt (needs d_feat == d_model)"
    ks = jax.random.split(key, 2 + 2 * num_layers)
    W_feat, b_feat = _linear(ks[0], d_feat, d_model)
    W_pred, b_pred = _linear(ks[1], d_model, d_feat)
    return dict(
        # kernel inputs stored in the model dtype (halves their DMA for bf16 models)
        W_feat=W_feat.astype(dtype), b_feat=b_feat.reshape(1, d_model).astype(dtype),
        W_pred=W_pred, b_pred=b_pred,
        pe=make_pe(d_model, max_len, dtype=dtype),
        enc_layers=[_enc_layer_init(ks[2 + i], d_model, d_ff) for i in range(num_layers)],
        dec_layers=[_dec_layer_init(ks[2 + num_layers + i], d_model, d_ff) for i in range(num_layers)],
    )


if __name__ == "__main__":
    key = jax.random.PRNGKey(0)

    # ------------------------------------------------------------------
    # 1) Standalone fused-kernel check at sizes that take the Pallas path
    #    (D = 128 lanes, N*T*F*D >= 1e7).
    # ------------------------------------------------------------------
    kx, kw, kb = jax.random.split(key, 3)
    N, F, T, D = 2, 128, 512, 128
    x_nft = jax.random.normal(kx, (N, F, T), dtype=jnp.float32)      # (N, F, T) — no transpose
    bound = 1.0 / math.sqrt(F)
    W = jax.random.uniform(kw, (F, D), jnp.float32, -bound, bound)
    b = jax.random.uniform(kb, (1, D), jnp.float32, -bound, bound)
    pe = make_pe(D, max_len=1000)

    ref = (jnp.einsum("nft,fd->ntd", x_nft, W, precision=jax.lax.Precision.HIGHEST)
           + b + pe[:T][None])

    got_f32 = jax.block_until_ready(feature_pos_encode(x_nft, W, b, pe, mxu_bf16=False))
    assert got_f32.shape == (N, T, D), got_f32.shape
    assert jnp.allclose(got_f32, ref, atol=1e-3, rtol=1e-3), \
        float(jnp.max(jnp.abs(got_f32 - ref)))

    got_bf16 = jax.block_until_ready(feature_pos_encode(x_nft, W, b, pe, mxu_bf16=True))
    assert jnp.allclose(got_bf16, ref, atol=5e-2, rtol=5e-2), \
        float(jnp.max(jnp.abs(got_bf16 - ref)))

    # ------------------------------------------------------------------
    # 2) Full Transformer forward at module-like small sizes (uses the
    #    plain-JAX fallback path for the feature layer, by design).
    # ------------------------------------------------------------------
    d_feat = d_model = 32
    nhead = 4
    num_layers = 2
    B, Tm = 2, 16                    # src: (batch, d_feat * T)

    kp, ks, kt = jax.random.split(jax.random.PRNGKey(0), 3)
    params = init_params(kp, d_feat, d_model, nhead, num_layers)
    src = jax.random.normal(ks, (B, d_feat * Tm), dtype=jnp.float32)
    tgt_input = jax.random.normal(kt, (1, B, d_model), dtype=jnp.float32)

    fwd = jax.jit(partial(transformer_forward, d_feat=d_feat, nhead=nhead))
    out = jax.block_until_ready(fwd(params, src, tgt_input))
    assert out.shape == (B, 5, d_model), out.shape
    assert bool(jnp.all(jnp.isfinite(out)))

    print("KERNEL_OK")
</pallas_src>

<mosaic_0001>
module attributes {stable_mosaic.version = 11 : i64} {
  func.func @_feature_pe_kernel(%arg0: i32, %arg1: i32, %arg2: memref<1x128x512xf32, #tpu.memory_space<vmem>>, %arg3: memref<128x128xf32, #tpu.memory_space<vmem>>, %arg4: memref<1x128xf32, #tpu.memory_space<vmem>>, %arg5: memref<512x128xf32, #tpu.memory_space<vmem>>, %arg6: memref<1x512x128xf32, #tpu.memory_space<vmem>>) attributes {dimension_semantics = [#tpu.dimension_semantics<parallel>, #tpu.dimension_semantics<parallel>], iteration_bounds = array<i64: 1, 2>, scalar_prefetch = 0 : i64, scratch_operands = 0 : i64, tpu.core_type = #tpu.core_type<tc>, window_params = [{transform_indices = @transform_0, window_bounds = array<i64: 1, 128, 512>}, {pipeline_mode = #tpu.pipeline_mode<synchronous>, transform_indices = @transform_1, window_bounds = array<i64: 128, 128>}, {pipeline_mode = #tpu.pipeline_mode<synchronous>, transform_indices = @transform_2, window_bounds = array<i64: 1, 128>}, {transform_indices = @transform_3, window_bounds = array<i64: 512, 128>}, {transform_indices = @transform_4, window_bounds = array<i64: 1, 512, 128>}]} {
    %c0 = arith.constant 0 : index
    %c0_0 = arith.constant 0 : index
    %c0_1 = arith.constant 0 : index
    %0 = vector.load %arg2[%c0, %c0_0, %c0_1] : memref<1x128x512xf32, #tpu.memory_space<vmem>>, vector<1x128x512xf32>
    %1 = vector.shape_cast %0 : vector<1x128x512xf32> to vector<128x512xf32>
    %c0_2 = arith.constant 0 : index
    %c0_3 = arith.constant 0 : index
    %2 = vector.load %arg3[%c0_2, %c0_3] : memref<128x128xf32, #tpu.memory_space<vmem>>, vector<128x128xf32>
    %cst = arith.constant dense<0.000000e+00> : vector<512x128xf32>
    %3 = tpu.matmul %1, %2, %cst {dimension_numbers = #tpu.dot_dimension_numbers<[0], [0], [1], [1], [0, 1, 1, 1], [], []>} : vector<128x512xf32>, vector<128x128xf32>, vector<512x128xf32> -> vector<512x128xf32>
    %c0_4 = arith.constant 0 : index
    %c0_5 = arith.constant 0 : index
    %4 = vector.load %arg4[%c0_4, %c0_5] : memref<1x128xf32, #tpu.memory_space<vmem>>, vector<1x128xf32>
    %5 = vector.broadcast %4 : vector<1x128xf32> to vector<512x128xf32>
    %6 = arith.addf %3, %5 : vector<512x128xf32>
    %c0_6 = arith.constant 0 : index
    %c0_7 = arith.constant 0 : index
    %7 = vector.load %arg5[%c0_6, %c0_7] : memref<512x128xf32, #tpu.memory_space<vmem>>, vector<512x128xf32>
    %8 = arith.addf %6, %7 : vector<512x128xf32>
    %c0_8 = arith.constant 0 : index
    %c0_9 = arith.constant 0 : index
    %c0_10 = arith.constant 0 : index
    %9 = vector.load %arg6[%c0_8, %c0_9, %c0_10] : memref<1x512x128xf32, #tpu.memory_space<vmem>>, vector<1x512x128xf32>
    %10 = vector.shape_cast %9 : vector<1x512x128xf32> to vector<512x128xf32>
    %11 = vector.shape_cast %8 : vector<512x128xf32> to vector<1x512x128xf32>
    tpu.vector_store %arg6[%c0_8, %c0_9, %c0_10], %11 {strides = array<i32>} : memref<1x512x128xf32, #tpu.memory_space<vmem>>, vector<1x512x128xf32>,
    return
  }
  func.func @transform_0(%arg0: i32, %arg1: i32) -> (i32, i32, i32) {
    %c0_i32 = arith.constant 0 : i32
    %c0_i32_0 = arith.constant 0 : i32
    return %arg1, %c0_i32, %arg0 : i32, i32, i32
  }
  func.func @transform_1(%arg0: i32, %arg1: i32) -> (i32, i32) {
    %c0_i32 = arith.constant 0 : i32
    %c0_i32_0 = arith.constant 0 : i32
    %c0_i32_1 = arith.constant 0 : i32
    return %c0_i32, %c0_i32_0 : i32, i32
  }
  func.func @transform_2(%arg0: i32, %arg1: i32) -> (i32, i32) {
    %c0_i32 = arith.constant 0 : i32
    %c0_i32_0 = arith.constant 0 : i32
    %c0_i32_1 = arith.constant 0 : i32
    return %c0_i32, %c0_i32_0 : i32, i32
  }
  func.func @transform_3(%arg0: i32, %arg1: i32) -> (i32, i32) {
    %c0_i32 = arith.constant 0 : i32
    %c0_i32_0 = arith.constant 0 : i32
    return %arg0, %c0_i32 : i32, i32
  }
  func.func @transform_4(%arg0: i32, %arg1: i32) -> (i32, i32, i32) {
    %c0_i32 = arith.constant 0 : i32
    %c0_i32_0 = arith.constant 0 : i32
    return %arg1, %arg0, %c0_i32 : i32, i32, i32
  }
}

</mosaic_0001>

<llo_original>
// kernel: tpu_custom_call.1
$region0: #{tpu_custom_call.1}
  #allocation0 [shape = 'u32[]', space=smem, size = 0x4, offset = 0x4, fixed_abs, tag = 'smem constant byte address 0x4 - core index']
  #allocation1 [shape = 'u32[144,128]{1,0:T(1,128)}', space=vmem, size = 0x12000, scoped, tag = 'internal scratch']
  %s0 = inlined_call_operand.hbm [shape: f32[2,128,512], index: 0, kind: input, shape index: {}]
  %s1 = inlined_call_operand.hbm [shape: f32[128,128], index: 1, kind: input, shape index: {}]
  %s2 = inlined_call_operand.vmem [shape: f32[1,128], index: 2, kind: input, shape index: {}]
  %s3 = inlined_call_operand.hbm [shape: f32[512,128], index: 3, kind: input, shape index: {}]
  %s4 = inlined_call_operand.hbm [shape: f32[2,512,128], index: 4, kind: output, shape index: {}]
  %s5 = sld [smem:[#allocation0]]
  $region61: #{tpu_custom_call.1} parent=0
    _
  %s7 = ssub.s32 1, %s5
  %s8 = scalar_select 0, %s7, %s5
  $region1: #{tpu_custom_call.1} parent=0
    #allocation2 [shape = 'u8[524288]{0}', space=vmem, size = 0x80000, scoped, tag = 'input window, operand 0']
    #allocation3 [shape = 's32[2]{0}', space=sflag, size = 0x8, scoped, tag = 'scoped memory for tpu_custom_call.1']
    #allocation4 [shape = 's32[2]{0}', space=sflag, size = 0x8, scoped, tag = 'scoped memory for tpu_custom_call.1']
    #allocation5 [shape = 'u8[65536]{0}', space=vmem, size = 0x10000, scoped, tag = 'input window, operand 1, single buffered']
    #allocation6 [shape = 's32[1]{0}', space=sflag, size = 0x4, scoped, tag = 'scoped memory for tpu_custom_call.1']
    #allocation7 [shape = 'u8[262144]{0}', space=vmem, size = 0x40000, scoped, tag = 'input window, operand 3, single buffered']
    #allocation8 [shape = 'u8[524288]{0}', space=vmem, size = 0x80000, scoped, tag = 'output window, operand 0']
    %9 = vsyncpa [#allocation3], 0
    %s10 = scalar_lea.sflag [#allocation3], 1
    %11 = vsyncpa %s10, 0
    %12 = vsyncpa [#allocation6], 0
    %13 = vsyncpa [#allocation4], 0
    %s14 = scalar_lea.sflag [#allocation4], 1
    %15 = vsyncpa %s14, 0
    loop: start=0, step=1, limit=4
    $region2: #{tpu_custom_call.1} parent=1 // loop_pre_header
      _
    $region3: #{tpu_custom_call.1} parent=1 // loop_header
      %s17 = sphi 0, %s21
      %p18 = scmp.ge.s32.totalorder %s17, 4
      %s24 = sphi 0, %s36
      %s25 = sphi 0, %s32
      %s26 = sphi 0, %s24
      %s27 = sphi 0, %s25
      %s28 = sphi 0, %s26
      %s29 = sphi 0, %s27
      %s41 = sphi 0, %s43
      %s44 = sphi 0, %s41
      %s45 = sphi 0, %s44
      %s61 = sphi 0, %s45
      %s65 = sphi 0, %s65
      %s67 = sphi 0, %s65
      %s68 = sphi 0, %s67
      %s82 = sphi 0, %s68
      %s86 = sphi 0, %s86
      %s88 = sphi 0, %s86
      %s89 = sphi 0, %s88
      %s103 = sphi 0, %s89
      %s109 = sphi 0, %s111
      %s112 = sphi 0, %s109
      %s113 = sphi 0, %s112
      %s129 = sphi 0, %s113
      %s137 = sphi 0, %s139
      %s140 = sphi 0, %s137
      %s141 = sphi 0, %s140
      %s157 = sphi 0, %s141
    $region4: #{tpu_custom_call.1} parent=1 // loop_header_branch
      %20 = sbr.rel (%p18) target = $region8
    $region5: #{tpu_custom_call.1} parent=1 // loop_body
      %s22 = ssub.s32 %s17, 1
      %s23 = ssub.s32 %s17, 2
      %s30 = sadd.s32 1, %s25
      %p31 = scmp.ge.s32.totalorder %s30, 2
      %s32 = scalar_select %p31, 0, %s30
      %s33 = sadd.s32 1, %s24
      %s34 = scalar_select %p31, %s33, %s24
      %p35 = scmp.ge.s32.totalorder %s34, 1
      %s36 = scalar_select %p35, 0, %s34
      %s37 = ssub.s32 %s25, %s32
      %s38 = ssub.s32 %s24, %s36
      %s39 = sor.u32 %s37, %s38
      %p40 = scmp.eq.s32.totalorder %s39, 0
      %s42 = sadd.s32 %s41, 1
      %s43 = scalar_select %p40, %s41, %s42
      %p46 = pneg %p40
      %p47 = scmp.eq.s32.totalorder %s17, 1
      %p48 = por %p46, %p47
      %p49 = scmp.ne.s32.totalorder %s41, %s44
      %p50 = scmp.eq.s32.totalorder %s17, 0
      %p51 = por %p49, %p50
      %p52 = scmp.ne.s32.totalorder %s41, %s44
      %p53 = scmp.eq.s32.totalorder %s22, 1
      %p54 = por %p52, %p53
      %p55 = scmp.ne.s32.totalorder %s44, %s45
      %p56 = scmp.eq.s32.totalorder %s22, 0
      %p57 = por %p55, %p56
      %p58 = scmp.ne.s32.totalorder %s44, %s45
      %p59 = scmp.eq.s32.totalorder %s23, 1
      %p60 = por %p58, %p59
      %p62 = scmp.ne.s32.totalorder %s45, %s61
      %p63 = scmp.eq.s32.totalorder %s23, 0
      %p64 = por %p62, %p63
      %s66 = sadd.s32 %s65, 1
      %p69 = scmp.eq.s32.totalorder %s17, 1
      %p70 = scmp.ne.s32.totalorder %s65, %s67
      %p71 = scmp.eq.s32.totalorder %s17, 0
      %p72 = por %p70, %p71
      %p73 = scmp.ne.s32.totalorder %s65, %s67
      %p74 = scmp.eq.s32.totalorder %s22, 1
      %p75 = por %p73, %p74
      %p76 = scmp.ne.s32.totalorder %s67, %s68
      %p77 = scmp.eq.s32.totalorder %s22, 0
      %p78 = por %p76, %p77
      %p79 = scmp.ne.s32.totalorder %s67, %s68
      %p80 = scmp.eq.s32.totalorder %s23, 1
      %p81 = por %p79, %p80
      %p83 = scmp.ne.s32.totalorder %s68, %s82
      %p84 = scmp.eq.s32.totalorder %s23, 0
      %p85 = por %p83, %p84
      %s87 = sadd.s32 %s86, 1
      %p90 = scmp.eq.s32.totalorder %s17, 1
      %p91 = scmp.ne.s32.totalorder %s86, %s88
      %p92 = scmp.eq.s32.totalorder %s17, 0
      %p93 = por %p91, %p92
      %p94 = scmp.ne.s32.totalorder %s86, %s88
      %p95 = scmp.eq.s32.totalorder %s22, 1
      %p96 = por %p94, %p95
      %p97 = scmp.ne.s32.totalorder %s88, %s89
      %p98 = scmp.eq.s32.totalorder %s22, 0
      %p99 = por %p97, %p98
      %p100 = scmp.ne.s32.totalorder %s88, %s89
      %p101 = scmp.eq.s32.totalorder %s23, 1
      %p102 = por %p100, %p101
      %p104 = scmp.ne.s32.totalorder %s89, %s103
      %p105 = scmp.eq.s32.totalorder %s23, 0
      %p106 = por %p104, %p105
      %s107 = ssub.s32 %s24, %s36
      %p108 = scmp.eq.s32.totalorder %s107, 0
      %s110 = sadd.s32 %s109, 1
      %s111 = scalar_select %p108, %s109, %s110
      %p114 = pneg %p108
      %p115 = scmp.eq.s32.totalorder %s17, 1
      %p116 = por %p114, %p115
      %p117 = scmp.ne.s32.totalorder %s109, %s112
      %p118 = scmp.eq.s32.totalorder %s17, 0
      %p119 = por %p117, %p118
      %p120 = scmp.ne.s32.totalorder %s109, %s112
      %p121 = scmp.eq.s32.totalorder %s22, 1
      %p122 = por %p120, %p121
      %p123 = scmp.ne.s32.totalorder %s112, %s113
      %p124 = scmp.eq.s32.totalorder %s22, 0
      %p125 = por %p123, %p124
      %p126 = scmp.ne.s32.totalorder %s112, %s113
      %p127 = scmp.eq.s32.totalorder %s23, 1
      %p128 = por %p126, %p127
      %p130 = scmp.ne.s32.totalorder %s113, %s129
      %p131 = scmp.eq.s32.totalorder %s23, 0
      %p132 = por %p130, %p131
      %s133 = ssub.s32 %s25, %s32
      %s134 = ssub.s32 %s24, %s36
      %s135 = sor.u32 %s133, %s134
      %p136 = scmp.eq.s32.totalorder %s135, 0
      %s138 = sadd.s32 %s137, 1
      %s139 = scalar_select %p136, %s137, %s138
      %p142 = pneg %p136
      %p143 = scmp.eq.s32.totalorder %s17, 1
      %p144 = por %p142, %p143
      %p145 = scmp.ne.s32.totalorder %s137, %s140
      %p146 = scmp.eq.s32.totalorder %s17, 0
      %p147 = por %p145, %p146
      %p148 = scmp.ne.s32.totalorder %s137, %s140
      %p149 = scmp.eq.s32.totalorder %s22, 1
      %p150 = por %p148, %p149
      %p151 = scmp.ne.s32.totalorder %s140, %s141
      %p152 = scmp.eq.s32.totalorder %s22, 0
      %p153 = por %p151, %p152
      %p154 = scmp.ne.s32.totalorder %s140, %s141
      %p155 = scmp.eq.s32.totalorder %s23, 1
      %p156 = por %p154, %p155
      %p158 = scmp.ne.s32.totalorder %s141, %s157
      %p159 = scmp.eq.s32.totalorder %s23, 0
      %p160 = por %p158, %p159
      %p161 = scmp.le.s32.totalorder 1, %s17
      %p162 = scmp.lt.s32.totalorder %s17, 3
      %p163 = pnand %p161, %p162
      %p164 = pneg %p163
      // Predicated region
      $region9: #{tpu_custom_call.1} parent=5 // pred_check
        _
      $region10: #{tpu_custom_call.1} parent=5 // pred_check_branch
        %166 = sbr.rel (%p163) target = $region12
      $region11: #{tpu_custom_call.1} parent=5 // pred_region
        %s167 = ssub.s32 %s17, 1
        // Predicated region
        $region13: #{tpu_custom_call.1} parent=11 // pred_check
          %p168 = pneg %p78
        $region14: #{tpu_custom_call.1} parent=11 // pred_check_branch
          %170 = sbr.rel (%p168) target = $region16
        $region15: #{tpu_custom_call.1} parent=11 // pred_region
          %s172 = ssub.s32 2048, 2048
          %173 = vsyncadd [#allocation6], %s172
          %s174 = sshll.u32 [#allocation5], 4
          %s175 = int_to_ptr.vmem [resolvable:$true] %s174
          %180 = dma.hbm_to_vmem [thread:$0]  %s1, 2048, %s175, [#allocation6], 128, 128, 8
        $region16: #{tpu_custom_call.1} parent=11 // pred_fallthru
          _
        // Predicated region
        $region17: #{tpu_custom_call.1} parent=11 // pred_check
          %p181 = pneg %p99
        $region18: #{tpu_custom_call.1} parent=11 // pred_check_branch
          %183 = sbr.rel (%p181) target = $region20
        $region19: #{tpu_custom_call.1} parent=11 // pred_region
          _
        $region20: #{tpu_custom_call.1} parent=11 // pred_fallthru
          _
        // Predicated region
        $region21: #{tpu_custom_call.1} parent=11 // pred_check
          %p184 = pneg %p125
        $region22: #{tpu_custom_call.1} parent=11 // pred_check_branch
          %186 = sbr.rel (%p184) target = $region24
        $region23: #{tpu_custom_call.1} parent=11 // pred_region
          %s187 = smul.u32 64, %s26
          %s189 = ssub.s32 8192, 8192
          %190 = vsyncadd [#allocation6], %s189
          %s191 = smul.addr %s187, 128
          %s192 = scalar_lea.hbm %s3, %s191
          %s193 = sshll.u32 [#allocation7], 4
          %s194 = int_to_ptr.vmem [resolvable:$true] %s193
          %199 = dma.hbm_to_vmem [thread:$0]  %s192, 8192, %s194, [#allocation6], 128, 128, 8
        $region24: #{tpu_custom_call.1} parent=11 // pred_fallthru
          _
      $region12: #{tpu_custom_call.1} parent=5 // pred_fallthru
        _
      %p200 = scmp.lt.s32.totalorder %s17, 2
      // Predicated region
      $region25: #{tpu_custom_call.1} parent=5 // pred_check
        %p201 = pneg %p200
      $region26: #{tpu_custom_call.1} parent=5 // pred_check_branch
        %203 = sbr.rel (%p201) target = $region28
      $region27: #{tpu_custom_call.1} parent=5 // pred_region
        // Predicated region
        $region29: #{tpu_custom_call.1} parent=27 // pred_check
          %p204 = pneg %p51
        $region30: #{tpu_custom_call.1} parent=27 // pred_check_branch
          %206 = sbr.rel (%p204) target = $region32
        $region31: #{tpu_custom_call.1} parent=27 // pred_region
          %s207 = sand.u32 %s41, 1
          %s208 = scalar_lea.sflag [#allocation3], %s207
          %s209 = sand.u32 %s41, 1
          %s210 = smul.addr %s209, 512
          %s211 = scalar_lea.vmem [#allocation2], %s210
          %s212 = smul.u32 4, %s24
          %s214 = ssub.s32 8192, 8192
          %215 = vsyncadd %s208, %s214
          %s216 = smul.addr %s25, 64
          %s217 = sadd.s32 %s212, %s216
          %s218 = smul.addr %s217, 128
          %s219 = scalar_lea.hbm %s0, %s218
          %s220 = sshll.u32 %s211, 4
          %s221 = int_to_ptr.vmem [resolvable:$true] %s220
          %226 = dma.hbm_to_vmem [thread:$0]  %s219, 8192, %s221, %s208, 512, 512, 32
        $region32: #{tpu_custom_call.1} parent=27 // pred_fallthru
          _
      $region28: #{tpu_custom_call.1} parent=5 // pred_fallthru
        _
      %p227 = scmp.le.s32.totalorder 1, %s17
      %p228 = scmp.lt.s32.totalorder %s17, 3
      %p229 = pnand %p227, %p228
      %p230 = pneg %p229
      // Predicated region
      $region33: #{tpu_custom_call.1} parent=5 // pred_check
        _
      $region34: #{tpu_custom_call.1} parent=5 // pred_check_branch
        %232 = sbr.rel (%p229) target = $region36
      $region35: #{tpu_custom_call.1} parent=5 // pred_region
        %s233 = ssub.s32 %s17, 1
        %s234 = sand.u32 %s44, 1
        %s235 = scalar_lea.sflag [#allocation3], %s234
        %s236 = sand.u32 %s44, 1
        %s237 = smul.addr %s236, 512
        %s238 = scalar_lea.vmem [#allocation2], %s237
        // Predicated region
        $region37: #{tpu_custom_call.1} parent=35 // pred_check
          %p239 = pneg %p57
        $region38: #{tpu_custom_call.1} parent=35 // pred_check_branch
          %241 = sbr.rel (%p239) target = $region40
        $region39: #{tpu_custom_call.1} parent=35 // pred_region
          %242 = dma.done %s235, 8192
        $region40: #{tpu_custom_call.1} parent=35 // pred_fallthru
          _
        // Predicated region
        $region41: #{tpu_custom_call.1} parent=35 // pred_check
          %p243 = pneg %p78
        $region42: #{tpu_custom_call.1} parent=35 // pred_check_branch
          %245 = sbr.rel (%p243) target = $region44
        $region43: #{tpu_custom_call.1} parent=35 // pred_region
          %246 = dma.done [#allocation6], 2048
        $region44: #{tpu_custom_call.1} parent=35 // pred_fallthru
          _
        // Predicated region
        $region45: #{tpu_custom_call.1} parent=35 // pred_check
          %p247 = pneg %p125
        $region46: #{tpu_custom_call.1} parent=35 // pred_check_branch
          %249 = sbr.rel (%p247) target = $region48
        $region47: #{tpu_custom_call.1} parent=35 // pred_region
          %250 = dma.done [#allocation6], 8192
        $region48: #{tpu_custom_call.1} parent=35 // pred_fallthru
          _
        %s251 = sand.u32 %s44, 1
        %s252 = scalar_lea.sflag [#allocation3], %s251
        %s253 = sand.u32 %s44, 1
        %s254 = smul.addr %s253, 512
        %s255 = scalar_lea.vmem [#allocation2], %s254
        %p256 = pneg %p57
        %p257 = pneg %p54
        %p258 = pneg %p78
        %p259 = pneg %p75
        %p260 = pneg %p99
        %p261 = pneg %p96
        %p262 = pneg %p125
        %p263 = pneg %p122
        %p264 = pneg %p153
        %p265 = pneg %p150
        %s266 = sand.u32 %s140, 1
        %s267 = scalar_lea.sflag [#allocation4], %s266
        %s268 = sand.u32 %s140, 1
        %s269 = smul.addr %s268, 512
        %s270 = scalar_lea.vmem [#allocation8], %s269
        %s271 = smul.u32 4, %s26
        %s272 = smul.u32 64, %s26
        %s273 = smul.u32 64, %s26
        %v274 = vld [vmem:[%s238] sm:$0xff]
        %v275 = vld [vmem:[%s238 + $0x8] sm:$0xff]
        %v276 = vld [vmem:[%s238 + $0x10] sm:$0xff]
        %v277 = vld [vmem:[%s238 + $0x18] sm:$0xff]
        %v278 = vld [vmem:[%s238 + $0x20] sm:$0xff]
        %v279 = vld [vmem:[%s238 + $0x28] sm:$0xff]
        %v280 = vld [vmem:[%s238 + $0x30] sm:$0xff]
        %v281 = vld [vmem:[%s238 + $0x38] sm:$0xff]
        %v282 = vld [vmem:[%s238 + $0x40] sm:$0xff]
        %v283 = vld [vmem:[%s238 + $0x48] sm:$0xff]
        %v284 = vld [vmem:[%s238 + $0x50] sm:$0xff]
        %v285 = vld [vmem:[%s238 + $0x58] sm:$0xff]
        %v286 = vld [vmem:[%s238 + $0x60] sm:$0xff]
        %v287 = vld [vmem:[%s238 + $0x68] sm:$0xff]
        %v288 = vld [vmem:[%s238 + $0x70] sm:$0xff]
        %v289 = vld [vmem:[%s238 + $0x78] sm:$0xff]
        %v290 = vld [vmem:[%s238 + $0x80] sm:$0xff]
        %v291 = vld [vmem:[%s238 + $0x88] sm:$0xff]
        %v292 = vld [vmem:[%s238 + $0x90] sm:$0xff]
        %v293 = vld [vmem:[%s238 + $0x98] sm:$0xff]
        %v294 = vld [vmem:[%s238 + $0xa0] sm:$0xff]
        %v295 = vld [vmem:[%s238 + $0xa8] sm:$0xff]
        %v296 = vld [vmem:[%s238 + $0xb0] sm:$0xff]
        %v297 = vld [vmem:[%s238 + $0xb8] sm:$0xff]
        %v298 = vld [vmem:[%s238 + $0xc0] sm:$0xff]
        %v299 = vld [vmem:[%s238 + $0xc8] sm:$0xff]
        %v300 = vld [vmem:[%s238 + $0xd0] sm:$0xff]
        %v301 = vld [vmem:[%s238 + $0xd8] sm:$0xff]
        %v302 = vld [vmem:[%s238 + $0xe0] sm:$0xff]
        %v303 = vld [vmem:[%s238 + $0xe8] sm:$0xff]
        %v304 = vld [vmem:[%s238 + $0xf0] sm:$0xff]
        %v305 = vld [vmem:[%s238 + $0xf8] sm:$0xff]
        %v306 = vld [vmem:[%s238 + $0x100] sm:$0xff]
        %v307 = vld [vmem:[%s238 + $0x108] sm:$0xff]
        %v308 = vld [vmem:[%s238 + $0x110] sm:$0xff]
        %v309 = vld [vmem:[%s238 + $0x118] sm:$0xff]
        %v310 = vld [vmem:[%s238 + $0x120] sm:$0xff]
        %v311 = vld [vmem:[%s238 + $0x128] sm:$0xff]
        %v312 = vld [vmem:[%s238 + $0x130] sm:$0xff]
        %v313 = vld [vmem:[%s238 + $0x138] sm:$0xff]
        %v314 = vld [vmem:[%s238 + $0x140] sm:$0xff]
        %v315 = vld [vmem:[%s238 + $0x148] sm:$0xff]
        %v316 = vld [vmem:[%s238 + $0x150] sm:$0xff]
        %v317 = vld [vmem:[%s238 + $0x158] sm:$0xff]
        %v318 = vld [vmem:[%s238 + $0x160] sm:$0xff]
        %v319 = vld [vmem:[%s238 + $0x168] sm:$0xff]
        %v320 = vld [vmem:[%s238 + $0x170] sm:$0xff]
        %v321 = vld [vmem:[%s238 + $0x178] sm:$0xff]
        %v322 = vld [vmem:[%s238 + $0x180] sm:$0xff]
        %v323 = vld [vmem:[%s238 + $0x188] sm:$0xff]
        %v324 = vld [vmem:[%s238 + $0x190] sm:$0xff]
        %v325 = vld [vmem:[%s238 + $0x198] sm:$0xff]
        %v326 = vld [vmem:[%s238 + $0x1a0] sm:$0xff]
        %v327 = vld [vmem:[%s238 + $0x1a8] sm:$0xff]
        %v328 = vld [vmem:[%s238 + $0x1b0] sm:$0xff]
        %v329 = vld [vmem:[%s238 + $0x1b8] sm:$0xff]
        %v330 = vld [vmem:[%s238 + $0x1c0] sm:$0xff]
        %v331 = vld [vmem:[%s238 + $0x1c8] sm:$0xff]
        %v332 = vld [vmem:[%s238 + $0x1d0] sm:$0xff]
        %v333 = vld [vmem:[%s238 + $0x1d8] sm:$0xff]
        %v334 = vld [vmem:[%s238 + $0x1e0] sm:$0xff]
        %v335 = vld [vmem:[%s238 + $0x1e8] sm:$0xff]
        %v336 = vld [vmem:[%s238 + $0x1f0] sm:$0xff]
        %v337 = vld [vmem:[%s238 + $0x1f8] sm:$0xff]
        %v338 = vld [vmem:[#allocation5] sm:$0xff]
        %v339 = vld [vmem:[#allocation5 + $0x8] sm:$0xff]
        %v340 = vld [vmem:[#allocation5 + $0x10] sm:$0xff]
        %v341 = vld [vmem:[#allocation5 + $0x18] sm:$0xff]
        %v342 = vld [vmem:[#allocation5 + $0x20] sm:$0xff]
        %v343 = vld [vmem:[#allocation5 + $0x28] sm:$0xff]
        %v344 = vld [vmem:[#allocation5 + $0x30] sm:$0xff]
        %v345 = vld [vmem:[#allocation5 + $0x38] sm:$0xff]
        %v346 = vld [vmem:[#allocation5 + $0x40] sm:$0xff]
        %v347 = vld [vmem:[#allocation5 + $0x48] sm:$0xff]
        %v348 = vld [vmem:[#allocation5 + $0x50] sm:$0xff]
        %v349 = vld [vmem:[#allocation5 + $0x58] sm:$0xff]
        %v350 = vld [vmem:[#allocation5 + $0x60] sm:$0xff]
        %v351 = vld [vmem:[#allocation5 + $0x68] sm:$0xff]
        %v352 = vld [vmem:[#allocation5 + $0x70] sm:$0xff]
        %v353 = vld [vmem:[#allocation5 + $0x78] sm:$0xff]
        %v354 = vld [vmem:[%s2] sm:$0x1]
        %v356 = vlaneseq
        %v357 = vshrl.u32 %v356, 7
        %v358 = vsub.s32 0, %v357
        %v359 = vrot.slane %v354, %v358
        %361 = vxpose.xlu0.b32.start [1/16] %v274, 128
        %362 = vxpose.xlu0.b32.cont [2/16] %v278, 128
        %363 = vxpose.xlu0.b32.cont [3/16] %v282, 128
        %364 = vxpose.xlu0.b32.cont [4/16] %v286, 128
        %365 = vxpose.xlu0.b32.cont [5/16] %v290, 128
        %366 = vxpose.xlu0.b32.cont [6/16] %v294, 128
        %367 = vxpose.xlu0.b32.cont [7/16] %v298, 128
        %368 = vxpose.xlu0.b32.cont [8/16] %v302, 128
        %369 = vxpose.xlu0.b32.cont [9/16] %v306, 128
        %370 = vxpose.xlu0.b32.cont [10/16] %v310, 128
        %371 = vxpose.xlu0.b32.cont [11/16] %v314, 128
        %372 = vxpose.xlu0.b32.cont [12/16] %v318, 128
        %373 = vxpose.xlu0.b32.cont [13/16] %v322, 128
        %374 = vxpose.xlu0.b32.cont [14/16] %v326, 128
        %375 = vxpose.xlu0.b32.cont [15/16] %v330, 128
        %376 = vxpose.xlu0.b32.end [16/16] %v334, 128
        %v377 = vpop.trf.xlu0
        %v378 = vpop.trf.xlu0
        %v379 = vpop.trf.xlu0
        %v380 = vpop.trf.xlu0
        %v381 = vpop.trf.xlu0
        %v382 = vpop.trf.xlu0
        %v383 = vpop.trf.xlu0
        %v384 = vpop.trf.xlu0
        %v385 = vpop.trf.xlu0
        %v386 = vpop.trf.xlu0
        %v387 = vpop.trf.xlu0
        %v388 = vpop.trf.xlu0
        %v389 = vpop.trf.xlu0
        %v390 = vpop.trf.xlu0
        %v391 = vpop.trf.xlu0
        %v392 = vpop.trf.xlu0
        %393 = vxpose.xlu0.b32.start [1/16] %v275, 128
        %394 = vxpose.xlu0.b32.cont [2/16] %v279, 128
        %395 = vxpose.xlu0.b32.cont [3/16] %v283, 128
        %396 = vxpose.xlu0.b32.cont [4/16] %v287, 128
        %397 = vxpose.xlu0.b32.cont [5/16] %v291, 128
        %398 = vxpose.xlu0.b32.cont [6/16] %v295, 128
        %399 = vxpose.xlu0.b32.cont [7/16] %v299, 128
        %400 = vxpose.xlu0.b32.cont [8/16] %v303, 128
        %401 = vxpose.xlu0.b32.cont [9/16] %v307, 128
        %402 = vxpose.xlu0.b32.cont [10/16] %v311, 128
        %403 = vxpose.xlu0.b32.cont [11/16] %v315, 128
        %404 = vxpose.xlu0.b32.cont [12/16] %v319, 128
        %405 = vxpose.xlu0.b32.cont [13/16] %v323, 128
        %406 = vxpose.xlu0.b32.cont [14/16] %v327, 128
        %407 = vxpose.xlu0.b32.cont [15/16] %v331, 128
        %408 = vxpose.xlu0.b32.end [16/16] %v335, 128
        %v409 = vpop.trf.xlu0
        %v410 = vpop.trf.xlu0
        %v411 = vpop.trf.xlu0
        %v412 = vpop.trf.xlu0
        %v413 = vpop.trf.xlu0
        %v414 = vpop.trf.xlu0
        %v415 = vpop.trf.xlu0
        %v416 = vpop.trf.xlu0
        %v417 = vpop.trf.xlu0
        %v418 = vpop.trf.xlu0
        %v419 = vpop.trf.xlu0
        %v420 = vpop.trf.xlu0
        %v421 = vpop.trf.xlu0
        %v422 = vpop.trf.xlu0
        %v423 = vpop.trf.xlu0
        %v424 = vpop.trf.xlu0
        %425 = vxpose.xlu0.b32.start [1/16] %v276, 128
        %426 = vxpose.xlu0.b32.cont [2/16] %v280, 128
        %427 = vxpose.xlu0.b32.cont [3/16] %v284, 128
        %428 = vxpose.xlu0.b32.cont [4/16] %v288, 128
        %429 = vxpose.xlu0.b32.cont [5/16] %v292, 128
        %430 = vxpose.xlu0.b32.cont [6/16] %v296, 128
        %431 = vxpose.xlu0.b32.cont [7/16] %v300, 128
        %432 = vxpose.xlu0.b32.cont [8/16] %v304, 128
        %433 = vxpose.xlu0.b32.cont [9/16] %v308, 128
        %434 = vxpose.xlu0.b32.cont [10/16] %v312, 128
        %435 = vxpose.xlu0.b32.cont [11/16] %v316, 128
        %436 = vxpose.xlu0.b32.cont [12/16] %v320, 128
        %437 = vxpose.xlu0.b32.cont [13/16] %v324, 128
        %438 = vxpose.xlu0.b32.cont [14/16] %v328, 128
        %439 = vxpose.xlu0.b32.cont [15/16] %v332, 128
        %440 = vxpose.xlu0.b32.end [16/16] %v336, 128
        %v441 = vpop.trf.xlu0
        %v442 = vpop.trf.xlu0
        %v443 = vpop.trf.xlu0
        %v444 = vpop.trf.xlu0
        %v445 = vpop.trf.xlu0
        %v446 = vpop.trf.xlu0
        %v447 = vpop.trf.xlu0
        %v448 = vpop.trf.xlu0
        %v449 = vpop.trf.xlu0
        %v450 = vpop.trf.xlu0
        %v451 = vpop.trf.xlu0
        %v452 = vpop.trf.xlu0
        %v453 = vpop.trf.xlu0
        %v454 = vpop.trf.xlu0
        %v455 = vpop.trf.xlu0
        %v456 = vpop.trf.xlu0
        %457 = vxpose.xlu0.b32.start [1/16] %v277, 128
        %458 = vxpose.xlu0.b32.cont [2/16] %v281, 128
        %459 = vxpose.xlu0.b32.cont [3/16] %v285, 128
        %460 = vxpose.xlu0.b32.cont [4/16] %v289, 128
        %461 = vxpose.xlu0.b32.cont [5/16] %v293, 128
        %462 = vxpose.xlu0.b32.cont [6/16] %v297, 128
        %463 = vxpose.xlu0.b32.cont [7/16] %v301, 128
        %464 = vxpose.xlu0.b32.cont [8/16] %v305, 128
        %465 = vxpose.xlu0.b32.cont [9/16] %v309, 128
        %466 = vxpose.xlu0.b32.cont [10/16] %v313, 128
        %467 = vxpose.xlu0.b32.cont [11/16] %v317, 128
        %468 = vxpose.xlu0.b32.cont [12/16] %v321, 128
        %469 = vxpose.xlu0.b32.cont [13/16] %v325, 128
        %470 = vxpose.xlu0.b32.cont [14/16] %v329, 128
        %471 = vxpose.xlu0.b32.cont [15/16] %v333, 128
        %472 = vxpose.xlu0.b32.end [16/16] %v337, 128
        %v473 = vpop.trf.xlu0
        %v474 = vpop.trf.xlu0
        %v475 = vpop.trf.xlu0
        %v476 = vpop.trf.xlu0
        %v477 = vpop.trf.xlu0
        %v478 = vpop.trf.xlu0
        %v479 = vpop.trf.xlu0
        %v480 = vpop.trf.xlu0
        %v481 = vpop.trf.xlu0
        %v482 = vpop.trf.xlu0
        %v483 = vpop.trf.xlu0
        %v484 = vpop.trf.xlu0
        %v485 = vpop.trf.xlu0
        %v486 = vpop.trf.xlu0
        %v487 = vpop.trf.xlu0
        %v488 = vpop.trf.xlu0
        %489 = vmatprep.subr.mxu0 0.0
        %490 = vmatpush1.msra.mxu0 %v338
        %491 = vmatprep.subr.mxu0 0.0
        %492 = vmatpush1.msra.mxu0 %v339
        %493 = vmatprep.subr.mxu0 0.0
        %494 = vmatpush1.msra.mxu0 %v340
        %495 = vmatprep.subr.mxu0 0.0
        %496 = vmatpush1.msra.mxu0 %v341
        %497 = vmatprep.subr.mxu0 0.0
        %498 = vmatpush1.msra.mxu0 %v342
        %499 = vmatprep.subr.mxu0 0.0
        %500 = vmatpush1.msra.mxu0 %v343
        %501 = vmatprep.subr.mxu0 0.0
        %502 = vmatpush1.msra.mxu0 %v344
        %503 = vmatprep.subr.mxu0 0.0
        %504 = vmatpush1.msra.mxu0 %v345
        %505 = vmatprep.subr.mxu0 0.0
        %506 = vmatpush1.msra.mxu0 %v346
        %507 = vmatprep.subr.mxu0 0.0
        %508 = vmatpush1.msra.mxu0 %v347
        %509 = vmatprep.subr.mxu0 0.0
        %510 = vmatpush1.msra.mxu0 %v348
        %511 = vmatprep.subr.mxu0 0.0
        %512 = vmatpush1.msra.mxu0 %v349
        %513 = vmatprep.subr.mxu0 0.0
        %514 = vmatpush1.msra.mxu0 %v350
        %515 = vmatprep.subr.mxu0 0.0
        %516 = vmatpush1.msra.mxu0 %v351
        %517 = vmatprep.subr.mxu0 0.0
        %518 = vmatpush1.msra.mxu0 %v352
        %519 = vmatprep.subr.mxu0 0.0
        %520 = vmatpush1.msra.mxu0 %v353
        %521 = vmatprep.subr.mxu0 0.0
        %522 = vmatpush1.msra.mxu0 0.0
        %523 = vmatprep.subr.mxu0 0.0
        %524 = vmatpush1.msra.mxu0 0.0
        %525 = vmatprep.subr.mxu0 0.0
        %526 = vmatpush1.msra.mxu0 0.0
        %527 = vmatprep.subr.mxu0 0.0
        %528 = vmatpush1.msra.mxu0 0.0
        %529 = vmatprep.subr.mxu0 0.0
        %530 = vmatpush1.msra.mxu0 0.0
        %531 = vmatprep.subr.mxu0 0.0
        %532 = vmatpush1.msra.mxu0 0.0
        %533 = vmatprep.subr.mxu0 0.0
        %534 = vmatpush1.msra.mxu0 0.0
        %535 = vmatprep.subr.mxu0 0.0
        %536 = vmatpush1.msra.mxu0 0.0
        %537 = vmatprep.subr.mxu0 0.0
        %538 = vmatpush1.msra.mxu0 0.0
        %539 = vmatprep.subr.mxu0 0.0
        %540 = vmatpush1.msra.mxu0 0.0
        %541 = vmatprep.subr.mxu0 0.0
        %542 = vmatpush1.msra.mxu0 0.0
        %543 = vmatprep.subr.mxu0 0.0
        %544 = vmatpush1.msra.mxu0 0.0
        %545 = vmatprep.subr.mxu0 0.0
        %546 = vmatpush1.msra.mxu0 0.0
        %547 = vmatprep.subr.mxu0 0.0
        %548 = vmatpush1.msra.mxu0 0.0
        %549 = vmatprep.subr.mxu0 0.0
        %550 = vmatpush1.msra.mxu0 0.0
        %551 = vmatprep.subr.mxu0 0.0
        %552 = vmatpush1.msra.mxu0 0.0
        %553 = vmatprep.mubr.f32.mxu0 0.0
        %554 = vmatmul.mubr.f32.gmra.mrb[0].mxu0 %v377
        %v555 = vpop.f32.mrb[0].mxu0
        %v556 = vadd.f32 %v359, %v555
        %v557 = vpop.f32.mrb[0].mxu0
        %558 = vmatprep.mubr.f32.mxu0 0.0
        %559 = vmatmul.mubr.f32.gmra.mrb[0].mxu0 %v378
        %v560 = vpop.f32.mrb[0].mxu0
        %v561 = vadd.f32 %v359, %v560
        %v562 = vpop.f32.mrb[0].mxu0
        %563 = vmatprep.mubr.f32.mxu0 0.0
        %564 = vmatmul.mubr.f32.gmra.mrb[0].mxu0 %v379
        %v565 = vpop.f32.mrb[0].mxu0
        %v566 = vadd.f32 %v359, %v565
        %v567 = vpop.f32.mrb[0].mxu0
        %568 = vmatprep.mubr.f32.mxu0 0.0
        %569 = vmatmul.mubr.f32.gmra.mrb[0].mxu0 %v380
        %v570 = vpop.f32.mrb[0].mxu0
        %v571 = vadd.f32 %v359, %v570
        %v572 = vpop.f32.mrb[0].mxu0
        %573 = vmatprep.mubr.f32.mxu0 0.0
        %574 = vmatmul.mubr.f32.gmra.mrb[0].mxu0 %v381
        %v575 = vpop.f32.mrb[0].mxu0
        %v576 = vadd.f32 %v359, %v575
        %v577 = vpop.f32.mrb[0].mxu0
        %578 = vmatprep.mubr.f32.mxu0 0.0
        %579 = vmatmul.mubr.f32.gmra.mrb[0].mxu0 %v382
        %v580 = vpop.f32.mrb[0].mxu0
        %v581 = vadd.f32 %v359, %v580
        %v582 = vpop.f32.mrb[0].mxu0
        %583 = vmatprep.mubr.f32.mxu0 0.0
        %584 = vmatmul.mubr.f32.gmra.mrb[0].mxu0 %v383
        %v585 = vpop.f32.mrb[0].mxu0
        %v586 = vadd.f32 %v359, %v585
        %v587 = vpop.f32.mrb[0].mxu0
        %588 = vmatprep.mubr.f32.mxu0 0.0
        %589 = vmatmul.mubr.f32.gmra.mrb[0].mxu0 %v384
        %v590 = vpop.f32.mrb[0].mxu0
        %v591 = vadd.f32 %v359, %v590
        %v592 = vpop.f32.mrb[0].mxu0
        %593 = vmatprep.mubr.f32.mxu0 0.0
        %594 = vmatmul.mubr.f32.gmra.mrb[0].mxu0 %v385
        %v595 = vpop.f32.mrb[0].mxu0
        %v596 = vadd.f32 %v359, %v595
        %v597 = vpop.f32.mrb[0].mxu0
        %598 = vmatprep.mubr.f32.mxu0 0.0
        %599 = vmatmul.mubr.f32.gmra.mrb[0].mxu0 %v386
        %v600 = vpop.f32.mrb[0].mxu0
        %v601 = vadd.f32 %v359, %v600
        %v602 = vpop.f32.mrb[0].mxu0
        %603 = vmatprep.mubr.f32.mxu0 0.0
        %604 = vmatmul.mubr.f32.gmra.mrb[0].mxu0 %v387
        %v605 = vpop.f32.mrb[0].mxu0
        %v606 = vadd.f32 %v359, %v605
        %v607 = vpop.f32.mrb[0].mxu0
        %608 = vmatprep.mubr.f32.mxu0 0.0
        %609 = vmatmul.mubr.f32.gmra.mrb[0].mxu0 %v388
        %v610 = vpop.f32.mrb[0].mxu0
        %v611 = vadd.f32 %v359, %v610
        %v612 = vpop.f32.mrb[0].mxu0
        %613 = vmatprep.mubr.f32.mxu0 0.0
        %614 = vmatmul.mubr.f32.gmra.mrb[0].mxu0 %v389
        %v615 = vpop.f32.mrb[0].mxu0
        %v616 = vadd.f32 %v359, %v615
        %v617 = vpop.f32.mrb[0].mxu0
        %618 = vmatprep.mubr.f32.mxu0 0.0
        %619 = vmatmul.mubr.f32.gmra.mrb[0].mxu0 %v390
        %v620 = vpop.f32.mrb[0].mxu0
        %v621 = vadd.f32 %v359, %v620
        %v622 = vpop.f32.mrb[0].mxu0
        %623 = vmatprep.mubr.f32.mxu0 0.0
        %624 = vmatmul.mubr.f32.gmra.mrb[0].mxu0 %v391
        %v625 = vpop.f32.mrb[0].mxu0
        %v626 = vadd.f32 %v359, %v625
        %v627 = vpop.f32.mrb[0].mxu0
        %628 = vmatprep.mubr.f32.mxu0 0.0
        %629 = vmatmul.mubr.f32.gmra.mrb[0].mxu0 %v392
        %v630 = vpop.f32.mrb[0].mxu0
        %v631 = vadd.f32 %v359, %v630
        %v632 = vpop.f32.mrb[0].mxu0
        %633 = vmatprep.mubr.f32.mxu0 0.0
        %634 = vmatmul.mubr.f32.gmra.mrb[0].mxu0 %v409
        %v635 = vpop.f32.mrb[0].mxu0
        %v636 = vadd.f32 %v359, %v635
        %v637 = vpop.f32.mrb[0].mxu0
        %638 = vmatprep.mubr.f32.mxu0 0.0
        %639 = vmatmul.mubr.f32.gmra.mrb[0].mxu0 %v410
        %v640 = vpop.f32.mrb[0].mxu0
        %v641 = vadd.f32 %v359, %v640
        %v642 = vpop.f32.mrb[0].mxu0
        %643 = vmatprep.mubr.f32.mxu0 0.0
        %644 = vmatmul.mubr.f32.gmra.mrb[0].mxu0 %v411
        %v645 = vpop.f32.mrb[0].mxu0
        %v646 = vadd.f32 %v359, %v645
        %v647 = vpop.f32.mrb[0].mxu0
        %648 = vmatprep.mubr.f32.mxu0 0.0
        %649 = vmatmul.mubr.f32.gmra.mrb[0].mxu0 %v412
        %v650 = vpop.f32.mrb[0].mxu0
        %v651 = vadd.f32 %v359, %v650
        %v652 = vpop.f32.mrb[0].mxu0
        %653 = vmatprep.mubr.f32.mxu0 0.0
        %654 = vmatmul.mubr.f32.gmra.mrb[0].mxu0 %v413
        %v655 = vpop.f32.mrb[0].mxu0
        %v656 = vadd.f32 %v359, %v655
        %v657 = vpop.f32.mrb[0].mxu0
        %658 = vmatprep.mubr.f32.mxu0 0.0
        %659 = vmatmul.mubr.f32.gmra.mrb[0].mxu0 %v414
        %v660 = vpop.f32.mrb[0].mxu0
        %v661 = vadd.f32 %v359, %v660
        %v662 = vpop.f32.mrb[0].mxu0
        %663 = vmatprep.mubr.f32.mxu0 0.0
        %664 = vmatmul.mubr.f32.gmra.mrb[0].mxu0 %v415
        %v665 = vpop.f32.mrb[0].mxu0
        %v666 = vadd.f32 %v359, %v665
        %v667 = vpop.f32.mrb[0].mxu0
        %668 = vmatprep.mubr.f32.mxu0 0.0
        %669 = vmatmul.mubr.f32.gmra.mrb[0].mxu0 %v416
        %v670 = vpop.f32.mrb[0].mxu0
        %v671 = vadd.f32 %v359, %v670
        %v672 = vpop.f32.mrb[0].mxu0
        %673 = vmatprep.mubr.f32.mxu0 0.0
        %674 = vmatmul.mubr.f32.gmra.mrb[0].mxu0 %v417
        %v675 = vpop.f32.mrb[0].mxu0
        %v676 = vadd.f32 %v359, %v675
        %v677 = vpop.f32.mrb[0].mxu0
        %678 = vmatprep.mubr.f32.mxu0 0.0
        %679 = vmatmul.mubr.f32.gmra.mrb[0].mxu0 %v418
        %v680 = vpop.f32.mrb[0].mxu0
        %v681 = vadd.f32 %v359, %v680
        %v682 = vpop.f32.mrb[0].mxu0
        %683 = vmatprep.mubr.f32.mxu0 0.0
        %684 = vmatmul.mubr.f32.gmra.mrb[0].mxu0 %v419
        %v685 = vpop.f32.mrb[0].mxu0
        %v686 = vadd.f32 %v359, %v685
        %v687 = vpop.f32.mrb[0].mxu0
        %688 = vmatprep.mubr.f32.mxu0 0.0
        %689 = vmatmul.mubr.f32.gmra.mrb[0].mxu0 %v420
        %v690 = vpop.f32.mrb[0].mxu0
        %v691 = vadd.f32 %v359, %v690
        %v692 = vpop.f32.mrb[0].mxu0
        %693 = vmatprep.mubr.f32.mxu0 0.0
        %694 = vmatmul.mubr.f32.gmra.mrb[0].mxu0 %v421
        %v695 = vpop.f32.mrb[0].mxu0
        %v696 = vadd.f32 %v359, %v695
        %v697 = vpop.f32.mrb[0].mxu0
        %698 = vmatprep.mubr.f32.mxu0 0.0
        %699 = vmatmul.mubr.f32.gmra.mrb[0].mxu0 %v422
        %v700 = vpop.f32.mrb[0].mxu0
        %v701 = vadd.f32 %v359, %v700
        %v702 = vpop.f32.mrb[0].mxu0
        %703 = vmatprep.mubr.f32.mxu0 0.0
        %704 = vmatmul.mubr.f32.gmra.mrb[0].mxu0 %v423
        %v705 = vpop.f32.mrb[0].mxu0
        %v706 = vadd.f32 %v359, %v705
        %v707 = vpop.f32.mrb[0].mxu0
        %708 = vmatprep.mubr.f32.mxu0 0.0
        %709 = vmatmul.mubr.f32.gmra.mrb[0].mxu0 %v424
        %v710 = vpop.f32.mrb[0].mxu0
        %v711 = vadd.f32 %v359, %v710
        %v712 = vpop.f32.mrb[0].mxu0
        %713 = vmatprep.mubr.f32.mxu0 0.0
        %714 = vmatmul.mubr.f32.gmra.mrb[0].mxu0 %v441
        %v715 = vpop.f32.mrb[0].mxu0
        %v716 = vadd.f32 %v359, %v715
        %v717 = vpop.f32.mrb[0].mxu0
        %718 = vmatprep.mubr.f32.mxu0 0.0
        %719 = vmatmul.mubr.f32.gmra.mrb[0].mxu0 %v442
        %v720 = vpop.f32.mrb[0].mxu0
        %v721 = vadd.f32 %v359, %v720
        %v722 = vpop.f32.mrb[0].mxu0
        %723 = vmatprep.mubr.f32.mxu0 0.0
        %724 = vmatmul.mubr.f32.gmra.mrb[0].mxu0 %v443
        %v725 = vpop.f32.mrb[0].mxu0
        %v726 = vadd.f32 %v359, %v725
        %v727 = vpop.f32.mrb[0].mxu0
        %728 = vmatprep.mubr.f32.mxu0 0.0
        %729 = vmatmul.mubr.f32.gmra.mrb[0].mxu0 %v444
        %v730 = vpop.f32.mrb[0].mxu0
        %v731 = vadd.f32 %v359, %v730
        %v732 = vpop.f32.mrb[0].mxu0
        %733 = vmatprep.mubr.f32.mxu0 0.0
        %734 = vmatmul.mubr.f32.gmra.mrb[0].mxu0 %v445
        %v735 = vpop.f32.mrb[0].mxu0
        %v736 = vadd.f32 %v359, %v735
        %v737 = vpop.f32.mrb[0].mxu0
        %738 = vmatprep.mubr.f32.mxu0 0.0
        %739 = vmatmul.mubr.f32.gmra.mrb[0].mxu0 %v446
        %v740 = vpop.f32.mrb[0].mxu0
        %v741 = vadd.f32 %v359, %v740
        %v742 = vpop.f32.mrb[0].mxu0
        %743 = vmatprep.mubr.f32.mxu0 0.0
        %744 = vmatmul.mubr.f32.gmra.mrb[0].mxu0 %v447
        %v745 = vpop.f32.mrb[0].mxu0
        %v746 = vadd.f32 %v359, %v745
        %v747 = vpop.f32.mrb[0].mxu0
        %748 = vmatprep.mubr.f32.mxu0 0.0
        %749 = vmatmul.mubr.f32.gmra.mrb[0].mxu0 %v448
        %v750 = vpop.f32.mrb[0].mxu0
        %v751 = vadd.f32 %v359, %v750
        %v752 = vpop.f32.mrb[0].mxu0
        %753 = vmatprep.mubr.f32.mxu0 0.0
        %754 = vmatmul.mubr.f32.gmra.mrb[0].mxu0 %v449
        %v755 = vpop.f32.mrb[0].mxu0
        %v756 = vadd.f32 %v359, %v755
        %v757 = vpop.f32.mrb[0].mxu0
        %758 = vmatprep.mubr.f32.mxu0 0.0
        %759 = vmatmul.mubr.f32.gmra.mrb[0].mxu0 %v450
        %v760 = vpop.f32.mrb[0].mxu0
        %v761 = vadd.f32 %v359, %v760
        %v762 = vpop.f32.mrb[0].mxu0
        %763 = vmatprep.mubr.f32.mxu0 0.0
        %764 = vmatmul.mubr.f32.gmra.mrb[0].mxu0 %v451
        %v765 = vpop.f32.mrb[0].mxu0
        %v766 = vadd.f32 %v359, %v765
        %v767 = vpop.f32.mrb[0].mxu0
        %768 = vmatprep.mubr.f32.mxu0 0.0
        %769 = vmatmul.mubr.f32.gmra.mrb[0].mxu0 %v452
        %v770 = vpop.f32.mrb[0].mxu0
        %v771 = vadd.f32 %v359, %v770
        %v772 = vpop.f32.mrb[0].mxu0
        %773 = vmatprep.mubr.f32.mxu0 0.0
        %774 = vmatmul.mubr.f32.gmra.mrb[0].mxu0 %v453
        %v775 = vpop.f32.mrb[0].mxu0
        %v776 = vadd.f32 %v359, %v775
        %v777 = vpop.f32.mrb[0].mxu0
        %778 = vmatprep.mubr.f32.mxu0 0.0
        %779 = vmatmul.mubr.f32.gmra.mrb[0].mxu0 %v454
        %v780 = vpop.f32.mrb[0].mxu0
        %v781 = vadd.f32 %v359, %v780
        %v782 = vpop.f32.mrb[0].mxu0
        %783 = vmatprep.mubr.f32.mxu0 0.0
        %784 = vmatmul.mubr.f32.gmra.mrb[0].mxu0 %v455
        %v785 = vpop.f32.mrb[0].mxu0
        %v786 = vadd.f32 %v359, %v785
        %v787 = vpop.f32.mrb[0].mxu0
        %788 = vmatprep.mubr.f32.mxu0 0.0
        %789 = vmatmul.mubr.f32.gmra.mrb[0].mxu0 %v456
        %v790 = vpop.f32.mrb[0].mxu0
        %v791 = vadd.f32 %v359, %v790
        %v792 = vpop.f32.mrb[0].mxu0
        %793 = vmatprep.mubr.f32.mxu0 0.0
        %794 = vmatmul.mubr.f32.gmra.mrb[0].mxu0 %v473
        %v795 = vpop.f32.mrb[0].mxu0
        %v796 = vadd.f32 %v359, %v795
        %v797 = vpop.f32.mrb[0].mxu0
        %798 = vmatprep.mubr.f32.mxu0 0.0
        %799 = vmatmul.mubr.f32.gmra.mrb[0].mxu0 %v474
        %v800 = vpop.f32.mrb[0].mxu0
        %v801 = vadd.f32 %v359, %v800
        %v802 = vpop.f32.mrb[0].mxu0
        %803 = vmatprep.mubr.f32.mxu0 0.0
        %804 = vmatmul.mubr.f32.gmra.mrb[0].mxu0 %v475
        %v805 = vpop.f32.mrb[0].mxu0
        %v806 = vadd.f32 %v359, %v805
        %v807 = vpop.f32.mrb[0].mxu0
        %808 = vmatprep.mubr.f32.mxu0 0.0
        %809 = vmatmul.mubr.f32.gmra.mrb[0].mxu0 %v476
        %v810 = vpop.f32.mrb[0].mxu0
        %v811 = vadd.f32 %v359, %v810
        %v812 = vpop.f32.mrb[0].mxu0
        %813 = vmatprep.mubr.f32.mxu0 0.0
        %814 = vmatmul.mubr.f32.gmra.mrb[0].mxu0 %v477
        %v815 = vpop.f32.mrb[0].mxu0
        %v816 = vadd.f32 %v359, %v815
        %v817 = vpop.f32.mrb[0].mxu0
        %818 = vmatprep.mubr.f32.mxu0 0.0
        %819 = vmatmul.mubr.f32.gmra.mrb[0].mxu0 %v478
        %v820 = vpop.f32.mrb[0].mxu0
        %v821 = vadd.f32 %v359, %v820
        %v822 = vpop.f32.mrb[0].mxu0
        %823 = vmatprep.mubr.f32.mxu0 0.0
        %824 = vmatmul.mubr.f32.gmra.mrb[0].mxu0 %v479
        %v825 = vpop.f32.mrb[0].mxu0
        %v826 = vadd.f32 %v359, %v825
        %v827 = vpop.f32.mrb[0].mxu0
        %828 = vmatprep.mubr.f32.mxu0 0.0
        %829 = vmatmul.mubr.f32.gmra.mrb[0].mxu0 %v480
        %v830 = vpop.f32.mrb[0].mxu0
        %v831 = vadd.f32 %v359, %v830
        %v832 = vpop.f32.mrb[0].mxu0
        %833 = vmatprep.mubr.f32.mxu0 0.0
        %834 = vmatmul.mubr.f32.gmra.mrb[0].mxu0 %v481
        %v835 = vpop.f32.mrb[0].mxu0
        %v836 = vadd.f32 %v359, %v835
        %v837 = vpop.f32.mrb[0].mxu0
        %838 = vmatprep.mubr.f32.mxu0 0.0
        %839 = vmatmul.mubr.f32.gmra.mrb[0].mxu0 %v482
        %v840 = vpop.f32.mrb[0].mxu0
        %v841 = vadd.f32 %v359, %v840
        %v842 = vpop.f32.mrb[0].mxu0
        %843 = vmatprep.mubr.f32.mxu0 0.0
        %844 = vmatmul.mubr.f32.gmra.mrb[0].mxu0 %v483
        %v845 = vpop.f32.mrb[0].mxu0
        %v846 = vadd.f32 %v359, %v845
        %v847 = vpop.f32.mrb[0].mxu0
        %848 = vmatprep.mubr.f32.mxu0 0.0
        %849 = vmatmul.mubr.f32.gmra.mrb[0].mxu0 %v484
        %v850 = vpop.f32.mrb[0].mxu0
        %v851 = vadd.f32 %v359, %v850
        %v852 = vpop.f32.mrb[0].mxu0
        %853 = vmatprep.mubr.f32.mxu0 0.0
        %854 = vmatmul.mubr.f32.gmra.mrb[0].mxu0 %v485
        %v855 = vpop.f32.mrb[0].mxu0
        %v856 = vadd.f32 %v359, %v855
        %v857 = vpop.f32.mrb[0].mxu0
        %858 = vmatprep.mubr.f32.mxu0 0.0
        %859 = vmatmul.mubr.f32.gmra.mrb[0].mxu0 %v486
        %v860 = vpop.f32.mrb[0].mxu0
        %v861 = vadd.f32 %v359, %v860
        %v862 = vpop.f32.mrb[0].mxu0
        %863 = vmatprep.mubr.f32.mxu0 0.0
        %864 = vmatmul.mubr.f32.gmra.mrb[0].mxu0 %v487
        %v865 = vpop.f32.mrb[0].mxu0
        %v866 = vadd.f32 %v359, %v865
        %v867 = vpop.f32.mrb[0].mxu0
        %868 = vmatprep.mubr.f32.mxu0 0.0
        %869 = vmatmul.mubr.f32.gmra.mrb[0].mxu0 %v488
        %v870 = vpop.f32.mrb[0].mxu0
        %v871 = vadd.f32 %v359, %v870
        %v872 = vpop.f32.mrb[0].mxu0
        %873 = vdwg.mxu0
        %v874 = vld [vmem:[#allocation7] sm:$0xff]
        %v875 = vld [vmem:[#allocation7 + $0x8] sm:$0xff]
        %v876 = vld [vmem:[#allocation7 + $0x10] sm:$0xff]
        %v877 = vld [vmem:[#allocation7 + $0x18] sm:$0xff]
        %v878 = vld [vmem:[#allocation7 + $0x20] sm:$0xff]
        %v879 = vld [vmem:[#allocation7 + $0x28] sm:$0xff]
        %v880 = vld [vmem:[#allocation7 + $0x30] sm:$0xff]
        %v881 = vld [vmem:[#allocation7 + $0x38] sm:$0xff]
        %v882 = vld [vmem:[#allocation7 + $0x40] sm:$0xff]
        %v883 = vld [vmem:[#allocation7 + $0x48] sm:$0xff]
        %v884 = vld [vmem:[#allocation7 + $0x50] sm:$0xff]
        %v885 = vld [vmem:[#allocation7 + $0x58] sm:$0xff]
        %v886 = vld [vmem:[#allocation7 + $0x60] sm:$0xff]
        %v887 = vld [vmem:[#allocation7 + $0x68] sm:$0xff]
        %v888 = vld [vmem:[#allocation7 + $0x70] sm:$0xff]
        %v889 = vld [vmem:[#allocation7 + $0x78] sm:$0xff]
        %v890 = vld [vmem:[#allocation7 + $0x80] sm:$0xff]
        %v891 = vld [vmem:[#allocation7 + $0x88] sm:$0xff]
        %v892 = vld [vmem:[#allocation7 + $0x90] sm:$0xff]
        %v893 = vld [vmem:[#allocation7 + $0x98] sm:$0xff]
        %v894 = vld [vmem:[#allocation7 + $0xa0] sm:$0xff]
        %v895 = vld [vmem:[#allocation7 + $0xa8] sm:$0xff]
        %v896 = vld [vmem:[#allocation7 + $0xb0] sm:$0xff]
        %v897 = vld [vmem:[#allocation7 + $0xb8] sm:$0xff]
        %v898 = vld [vmem:[#allocation7 + $0xc0] sm:$0xff]
        %v899 = vld [vmem:[#allocation7 + $0xc8] sm:$0xff]
        %v900 = vld [vmem:[#allocation7 + $0xd0] sm:$0xff]
        %v901 = vld [vmem:[#allocation7 + $0xd8] sm:$0xff]
        %v902 = vld [vmem:[#allocation7 + $0xe0] sm:$0xff]
        %v903 = vld [vmem:[#allocation7 + $0xe8] sm:$0xff]
        %v904 = vld [vmem:[#allocation7 + $0xf0] sm:$0xff]
        %v905 = vld [vmem:[#allocation7 + $0xf8] sm:$0xff]
        %v906 = vld [vmem:[#allocation7 + $0x100] sm:$0xff]
        %v907 = vld [vmem:[#allocation7 + $0x108] sm:$0xff]
        %v908 = vld [vmem:[#allocation7 + $0x110] sm:$0xff]
        %v909 = vld [vmem:[#allocation7 + $0x118] sm:$0xff]
        %v910 = vld [vmem:[#allocation7 + $0x120] sm:$0xff]
        %v911 = vld [vmem:[#allocation7 + $0x128] sm:$0xff]
        %v912 = vld [vmem:[#allocation7 + $0x130] sm:$0xff]
        %v913 = vld [vmem:[#allocation7 + $0x138] sm:$0xff]
        %v914 = vld [vmem:[#allocation7 + $0x140] sm:$0xff]
        %v915 = vld [vmem:[#allocation7 + $0x148] sm:$0xff]
        %v916 = vld [vmem:[#allocation7 + $0x150] sm:$0xff]
        %v917 = vld [vmem:[#allocation7 + $0x158] sm:$0xff]
        %v918 = vld [vmem:[#allocation7 + $0x160] sm:$0xff]
        %v919 = vld [vmem:[#allocation7 + $0x168] sm:$0xff]
        %v920 = vld [vmem:[#allocation7 + $0x170] sm:$0xff]
        %v921 = vld [vmem:[#allocation7 + $0x178] sm:$0xff]
        %v922 = vld [vmem:[#allocation7 + $0x180] sm:$0xff]
        %v923 = vld [vmem:[#allocation7 + $0x188] sm:$0xff]
        %v924 = vld [vmem:[#allocation7 + $0x190] sm:$0xff]
        %v925 = vld [vmem:[#allocation7 + $0x198] sm:$0xff]
        %v926 = vld [vmem:[#allocation7 + $0x1a0] sm:$0xff]
        %v927 = vld [vmem:[#allocation7 + $0x1a8] sm:$0xff]
        %v928 = vld [vmem:[#allocation7 + $0x1b0] sm:$0xff]
        %v929 = vld [vmem:[#allocation7 + $0x1b8] sm:$0xff]
        %v930 = vld [vmem:[#allocation7 + $0x1c0] sm:$0xff]
        %v931 = vld [vmem:[#allocation7 + $0x1c8] sm:$0xff]
        %v932 = vld [vmem:[#allocation7 + $0x1d0] sm:$0xff]
        %v933 = vld [vmem:[#allocation7 + $0x1d8] sm:$0xff]
        %v934 = vld [vmem:[#allocation7 + $0x1e0] sm:$0xff]
        %v935 = vld [vmem:[#allocation7 + $0x1e8] sm:$0xff]
        %v936 = vld [vmem:[#allocation7 + $0x1f0] sm:$0xff]
        %v937 = vld [vmem:[#allocation7 + $0x1f8] sm:$0xff]
        %v938 = vadd.f32 %v556, %v874
        %v939 = vadd.f32 %v561, %v875
        %v940 = vadd.f32 %v566, %v876
        %v941 = vadd.f32 %v571, %v877
        %v942 = vadd.f32 %v576, %v878
        %v943 = vadd.f32 %v581, %v879
        %v944 = vadd.f32 %v586, %v880
        %v945 = vadd.f32 %v591, %v881
        %v946 = vadd.f32 %v596, %v882
        %v947 = vadd.f32 %v601, %v883
        %v948 = vadd.f32 %v606, %v884
        %v949 = vadd.f32 %v611, %v885
        %v950 = vadd.f32 %v616, %v886
        %v951 = vadd.f32 %v621, %v887
        %v952 = vadd.f32 %v626, %v888
        %v953 = vadd.f32 %v631, %v889
        %v954 = vadd.f32 %v636, %v890
        %v955 = vadd.f32 %v641, %v891
        %v956 = vadd.f32 %v646, %v892
        %v957 = vadd.f32 %v651, %v893
        %v958 = vadd.f32 %v656, %v894
        %v959 = vadd.f32 %v661, %v895
        %v960 = vadd.f32 %v666, %v896
        %v961 = vadd.f32 %v671, %v897
        %v962 = vadd.f32 %v676, %v898
        %v963 = vadd.f32 %v681, %v899
        %v964 = vadd.f32 %v686, %v900
        %v965 = vadd.f32 %v691, %v901
        %v966 = vadd.f32 %v696, %v902
        %v967 = vadd.f32 %v701, %v903
        %v968 = vadd.f32 %v706, %v904
        %v969 = vadd.f32 %v711, %v905
        %v970 = vadd.f32 %v716, %v906
        %v971 = vadd.f32 %v721, %v907
        %v972 = vadd.f32 %v726, %v908
        %v973 = vadd.f32 %v731, %v909
        %v974 = vadd.f32 %v736, %v910
        %v975 = vadd.f32 %v741, %v911
        %v976 = vadd.f32 %v746, %v912
        %v977 = vadd.f32 %v751, %v913
        %v978 = vadd.f32 %v756, %v914
        %v979 = vadd.f32 %v761, %v915
        %v980 = vadd.f32 %v766, %v916
        %v981 = vadd.f32 %v771, %v917
        %v982 = vadd.f32 %v776, %v918
        %v983 = vadd.f32 %v781, %v919
        %v984 = vadd.f32 %v786, %v920
        %v985 = vadd.f32 %v791, %v921
        %v986 = vadd.f32 %v796, %v922
        %v987 = vadd.f32 %v801, %v923
        %v988 = vadd.f32 %v806, %v924
        %v989 = vadd.f32 %v811, %v925
        %v990 = vadd.f32 %v816, %v926
        %v991 = vadd.f32 %v821, %v927
        %v992 = vadd.f32 %v826, %v928
        %v993 = vadd.f32 %v831, %v929
        %v994 = vadd.f32 %v836, %v930
        %v995 = vadd.f32 %v841, %v931
        %v996 = vadd.f32 %v846, %v932
        %v997 = vadd.f32 %v851, %v933
        %v998 = vadd.f32 %v856, %v934
        %v999 = vadd.f32 %v861, %v935
        %v1000 = vadd.f32 %v866, %v936
        %v1001 = vadd.f32 %v871, %v937
        %1002 = vst [vmem:[%s270] sm:$0xff] %v938
        %1003 = vst [vmem:[%s270 + $0x8] sm:$0xff] %v939
        %1004 = vst [vmem:[%s270 + $0x10] sm:$0xff] %v940
        %1005 = vst [vmem:[%s270 + $0x18] sm:$0xff] %v941
        %1006 = vst [vmem:[%s270 + $0x20] sm:$0xff] %v942
        %1007 = vst [vmem:[%s270 + $0x28] sm:$0xff] %v943
        %1008 = vst [vmem:[%s270 + $0x30] sm:$0xff] %v944
        %1009 = vst [vmem:[%s270 + $0x38] sm:$0xff] %v945
        %1010 = vst [vmem:[%s270 + $0x40] sm:$0xff] %v946
        %1011 = vst [vmem:[%s270 + $0x48] sm:$0xff] %v947
        %1012 = vst [vmem:[%s270 + $0x50] sm:$0xff] %v948
        %1013 = vst [vmem:[%s270 + $0x58] sm:$0xff] %v949
        %1014 = vst [vmem:[%s270 + $0x60] sm:$0xff] %v950
        %1015 = vst [vmem:[%s270 + $0x68] sm:$0xff] %v951
        %1016 = vst [vmem:[%s270 + $0x70] sm:$0xff] %v952
        %1017 = vst [vmem:[%s270 + $0x78] sm:$0xff] %v953
        %1018 = vst [vmem:[%s270 + $0x80] sm:$0xff] %v954
        %1019 = vst [vmem:[%s270 + $0x88] sm:$0xff] %v955
        %1020 = vst [vmem:[%s270 + $0x90] sm:$0xff] %v956
        %1021 = vst [vmem:[%s270 + $0x98] sm:$0xff] %v957
        %1022 = vst [vmem:[%s270 + $0xa0] sm:$0xff] %v958
        %1023 = vst [vmem:[%s270 + $0xa8] sm:$0xff] %v959
        %1024 = vst [vmem:[%s270 + $0xb0] sm:$0xff] %v960
        %1025 = vst [vmem:[%s270 + $0xb8] sm:$0xff] %v961
        %1026 = vst [vmem:[%s270 + $0xc0] sm:$0xff] %v962
        %1027 = vst [vmem:[%s270 + $0xc8] sm:$0xff] %v963
        %1028 = vst [vmem:[%s270 + $0xd0] sm:$0xff] %v964
        %1029 = vst [vmem:[%s270 + $0xd8] sm:$0xff] %v965
        %1030 = vst [vmem:[%s270 + $0xe0] sm:$0xff] %v966
        %1031 = vst [vmem:[%s270 + $0xe8] sm:$0xff] %v967
        %1032 = vst [vmem:[%s270 + $0xf0] sm:$0xff] %v968
        %1033 = vst [vmem:[%s270 + $0xf8] sm:$0xff] %v969
        %1034 = vst [vmem:[%s270 + $0x100] sm:$0xff] %v970
        %1035 = vst [vmem:[%s270 + $0x108] sm:$0xff] %v971
        %1036 = vst [vmem:[%s270 + $0x110] sm:$0xff] %v972
        %1037 = vst [vmem:[%s270 + $0x118] sm:$0xff] %v973
        %1038 = vst [vmem:[%s270 + $0x120] sm:$0xff] %v974
        %1039 = vst [vmem:[%s270 + $0x128] sm:$0xff] %v975
        %1040 = vst [vmem:[%s270 + $0x130] sm:$0xff] %v976
        %1041 = vst [vmem:[%s270 + $0x138] sm:$0xff] %v977
        %1042 = vst [vmem:[%s270 + $0x140] sm:$0xff] %v978
        %1043 = vst [vmem:[%s270 + $0x148] sm:$0xff] %v979
        %1044 = vst [vmem:[%s270 + $0x150] sm:$0xff] %v980
        %1045 = vst [vmem:[%s270 + $0x158] sm:$0xff] %v981
        %1046 = vst [vmem:[%s270 + $0x160] sm:$0xff] %v982
        %1047 = vst [vmem:[%s270 + $0x168] sm:$0xff] %v983
        %1048 = vst [vmem:[%s270 + $0x170] sm:$0xff] %v984
        %1049 = vst [vmem:[%s270 + $0x178] sm:$0xff] %v985
        %1050 = vst [vmem:[%s270 + $0x180] sm:$0xff] %v986
        %1051 = vst [vmem:[%s270 + $0x188] sm:$0xff] %v987
        %1052 = vst [vmem:[%s270 + $0x190] sm:$0xff] %v988
        %1053 = vst [vmem:[%s270 + $0x198] sm:$0xff] %v989
        %1054 = vst [vmem:[%s270 + $0x1a0] sm:$0xff] %v990
        %1055 = vst [vmem:[%s270 + $0x1a8] sm:$0xff] %v991
        %1056 = vst [vmem:[%s270 + $0x1b0] sm:$0xff] %v992
        %1057 = vst [vmem:[%s270 + $0x1b8] sm:$0xff] %v993
        %1058 = vst [vmem:[%s270 + $0x1c0] sm:$0xff] %v994
        %1059 = vst [vmem:[%s270 + $0x1c8] sm:$0xff] %v995
        %1060 = vst [vmem:[%s270 + $0x1d0] sm:$0xff] %v996
        %1061 = vst [vmem:[%s270 + $0x1d8] sm:$0xff] %v997
        %1062 = vst [vmem:[%s270 + $0x1e0] sm:$0xff] %v998
        %1063 = vst [vmem:[%s270 + $0x1e8] sm:$0xff] %v999
        %1064 = vst [vmem:[%s270 + $0x1f0] sm:$0xff] %v1000
        %1065 = vst [vmem:[%s270 + $0x1f8] sm:$0xff] %v1001
        %s1066 = sand.u32 %s140, 1
        %s1067 = scalar_lea.sflag [#allocation4], %s1066
        %s1068 = sand.u32 %s140, 1
        %s1069 = smul.addr %s1068, 512
        %s1070 = scalar_lea.vmem [#allocation8], %s1069
        // Predicated region
        $region49: #{tpu_custom_call.1} parent=35 // pred_check
          %p1071 = pneg %p150
        $region50: #{tpu_custom_call.1} parent=35 // pred_check_branch
          %1073 = sbr.rel (%p1071) target = $region52
        $region51: #{tpu_custom_call.1} parent=35 // pred_region
          %s1074 = smul.u32 64, %s26
          %s1076 = ssub.s32 8192, 8192
          %1077 = vsyncadd %s1067, %s1076
          %s1078 = smul.addr %s27, 64
          %s1079 = sadd.s32 %s1074, %s1078
          %s1080 = smul.addr %s1079, 128
          %s1081 = scalar_lea.hbm %s4, %s1080
          %s1082 = sshll.u32 %s1070, 4
          %s1083 = int_to_ptr.vmem [resolvable:$true] %s1082
          %1088 = dma.vmem_to_hbm [thread:$0]  %s1083, 8192, %s1081, %s1067, 128, 128, 8
        $region52: #{tpu_custom_call.1} parent=35 // pred_fallthru
          _
      $region36: #{tpu_custom_call.1} parent=5 // pred_fallthru
        _
      %p1089 = scmp.le.s32.totalorder 2, %s17
      // Predicated region
      $region53: #{tpu_custom_call.1} parent=5 // pred_check
        %p1090 = pneg %p1089
      $region54: #{tpu_custom_call.1} parent=5 // pred_check_branch
        %1092 = sbr.rel (%p1090) target = $region56
      $region55: #{tpu_custom_call.1} parent=5 // pred_region
        %s1093 = ssub.s32 %s17, 2
        // Predicated region
        $region57: #{tpu_custom_call.1} parent=55 // pred_check
          %p1094 = pneg %p156
        $region58: #{tpu_custom_call.1} parent=55 // pred_check_branch
          %1096 = sbr.rel (%p1094) target = $region60
        $region59: #{tpu_custom_call.1} parent=55 // pred_region
          %s1097 = sand.u32 %s141, 1
          %s1098 = scalar_lea.sflag [#allocation4], %s1097
          %s1099 = sand.u32 %s141, 1
          %s1100 = smul.addr %s1099, 512
          %s1101 = scalar_lea.vmem [#allocation8], %s1100
          %1102 = dma.done %s1098, 8192
        $region60: #{tpu_custom_call.1} parent=55 // pred_fallthru
          _
      $region56: #{tpu_custom_call.1} parent=5 // pred_fallthru
        _
    $region6: #{tpu_custom_call.1} parent=1 // loop_footer
      %s21 = sadd.s32 1, %s17
    $region7: #{tpu_custom_call.1} parent=1 // loop_footer_branch
      %16 = sbr.rel target = $region3
    $region8: #{tpu_custom_call.1} parent=1 // loop_exit
      _
    %1103 = vsyncpa [#allocation3], 1
    %s1104 = scalar_lea.sflag [#allocation3], 1
    %1105 = vsyncpa %s1104, 1
    %1106 = vsyncpa [#allocation6], 1
    %1107 = vsyncpa [#allocation4], 1
    %s1108 = scalar_lea.sflag [#allocation4], 1
    %1109 = vsyncpa %s1108, 1

</llo_original>
